<compile_context>
chip_gen: v7x
topology: tpu7x:2x2x1
jax: 0.10.0
libtpu: 0.0.40
codegen_flags: <defaults>
</compile_context>

<pallas_src>
import jax
import jax.numpy as jnp
from jax.experimental import pallas as pl
from jax.experimental.pallas import tpu as pltpu

LANE = 128
SUBLANE = 8
# Budget for the double-buffered activation tiles (inputs + output); kept well
# under the 32 MiB scoped-VMEM default (v7x physical VMEM is 64 MiB).
_VMEM_ACT_BUDGET = 16 * 1024 * 1024


def _round_up(x, m):
    return (x + m - 1) // m * m


def fdm_mlp_kernel(obs_ref, act_ref, w1o_ref, w1a_ref, b1_ref,
                   w2_ref, b2_ref, w3_ref, b3_ref, out_ref):
    """Fused 3-layer MLP (tanh, tanh, linear) on one batch tile.

    The concat of [observation, action] is never materialized: the first layer
    is obs @ W1_obs + act @ W1_act. Inputs are cast to f32 after the DMA, so
    bf16/f16 activations travel HBM->VMEM at their native width.
    """
    obs = obs_ref[...].astype(jnp.float32)
    act = act_ref[...].astype(jnp.float32)
    h1 = jnp.tanh(
        jnp.dot(obs, w1o_ref[...], preferred_element_type=jnp.float32)
        + jnp.dot(act, w1a_ref[...], preferred_element_type=jnp.float32)
        + b1_ref[...]
    )
    h2 = jnp.tanh(
        jnp.dot(h1, w2_ref[...], preferred_element_type=jnp.float32) + b2_ref[...]
    )
    out = jnp.dot(h2, w3_ref[...], preferred_element_type=jnp.float32) + b3_ref[...]
    out_ref[...] = out.astype(out_ref.dtype)


def _fdm_mlp_jnp(observation, action, params):
    """Plain-JAX path (small-batch fallback and reference math)."""
    w1_obs, w1_act, b1, w2, b2, w3, b3 = params
    obs = observation.astype(jnp.float32)
    act = action.astype(jnp.float32)
    h1 = jnp.tanh(obs @ w1_obs + act @ w1_act + b1)
    h2 = jnp.tanh(h1 @ w2 + b2)
    return h2 @ w3 + b3


def forward_dynamics_forward(observation, action, params, *,
                             block_batch=8192, min_pallas_batch=512):
    """ForwardDynamicsContinuousActionsModel.forward in JAX + Pallas.

    params = (w1_obs, w1_act, b1, w2, b2, w3, b3) from init_params; the hidden
    dim may be zero-padded to a lane multiple (numerically neutral).
    """
    w1_obs, w1_act, b1, w2, b2, w3, b3 = params
    obs_size = w1_obs.shape[0]
    act_size = w1_act.shape[0]
    hidden = w1_obs.shape[1]
    out_size = w3.shape[1]

    B = observation.shape[0]

    # Small-batch fallback: below roughly one grid step of work, the fused XLA
    # MLP beats the pallas_call fixed launch + DMA setup cost.
    if B < max(min_pallas_batch, 1):
        return _fdm_mlp_jnp(observation, action, params)

    # --- batch-tile selection -------------------------------------------------
    # Double-buffered per-row bytes for the streamed tiles (obs + act in native
    # dtype, f32 output). Weights are resident and not counted here.
    row_bytes = 2 * (observation.dtype.itemsize * obs_size
                     + action.dtype.itemsize * act_size
                     + 4 * out_size)
    tb_cap = max(SUBLANE, (_VMEM_ACT_BUDGET // row_bytes) // SUBLANE * SUBLANE)
    tb_target = max(SUBLANE, min(block_batch, tb_cap))

    if B <= tb_target:
        # Single tile: block == full batch dim is always legal, no padding.
        n_steps, tb, b_pad = 1, B, B
    else:
        # Spread rows evenly over the steps so padding is < 8 * n_steps rows
        # (avoids DMA'ing a whole near-empty tile for unlucky batch sizes).
        b_sub = _round_up(B, SUBLANE)
        n_steps = -(-b_sub // tb_target)
        tb = _round_up(-(-b_sub // n_steps), SUBLANE)
        b_pad = n_steps * tb
        if b_pad != B:
            pad = b_pad - B
            observation = jnp.pad(observation, ((0, pad), (0, 0)))
            action = jnp.pad(action, ((0, pad), (0, 0)))

    def resident(arr):
        # Whole array as one block, same block every grid step -> VMEM-resident.
        return pl.BlockSpec(arr.shape, lambda i: (0, 0))

    flops = 2 * b_pad * hidden * (obs_size + act_size + hidden + out_size)
    bytes_accessed = (observation.dtype.itemsize * b_pad * obs_size
                      + action.dtype.itemsize * b_pad * act_size
                      + 4 * b_pad * out_size
                      + 4 * ((obs_size + act_size + hidden + 2) * hidden
                             + (hidden + 1) * out_size))

    out = pl.pallas_call(
        fdm_mlp_kernel,
        out_shape=jax.ShapeDtypeStruct((b_pad, out_size), jnp.float32),
        grid=(n_steps,),
        in_specs=[
            pl.BlockSpec((tb, obs_size), lambda i: (i, 0)),
            pl.BlockSpec((tb, act_size), lambda i: (i, 0)),
            resident(w1_obs), resident(w1_act), resident(b1),
            resident(w2), resident(b2), resident(w3), resident(b3),
        ],
        # True output width: last dim == full array dim is legal; the (cheap)
        # masked store beats writing + re-slicing 128 lanes of zeros.
        out_specs=pl.BlockSpec((tb, out_size), lambda i: (i, 0)),
        compiler_params=pltpu.CompilerParams(
            dimension_semantics=("parallel",)),   # batch sharded across TCs on v7x
        cost_estimate=pl.CostEstimate(
            flops=flops,
            transcendentals=2 * b_pad * hidden,
            bytes_accessed=bytes_accessed),
    )(observation, action, w1_obs, w1_act, b1, w2, b2, w3, b3)

    return out if b_pad == B else out[:B]


def init_params(key, observation_size, hidden_size, action_size,
                output_gain=1.0, pad_hidden=True):
    """Deterministic init for MLP(obs+act -> hidden -> hidden -> obs), n_layers=3.

    W1 is returned pre-split into (obs, act) halves. If pad_hidden, the hidden
    dim is zero-padded to a multiple of 128 — numerically exact, since tanh(0)=0
    and the padded hidden features only ever multiply zero weight rows.
    """
    in_size = observation_size + action_size
    key, k1, k2, k3 = jax.random.split(key, 4)
    # PyTorch stores Linear.weight as [out, in]; we build [in, out] for x @ W.
    w1 = jax.random.normal(k1, (in_size, hidden_size), jnp.float32) / jnp.sqrt(in_size)
    w2 = jax.random.normal(k2, (hidden_size, hidden_size), jnp.float32) / jnp.sqrt(hidden_size)
    w3 = output_gain * jax.random.normal(
        k3, (hidden_size, observation_size), jnp.float32) / jnp.sqrt(hidden_size)

    hp = _round_up(hidden_size, LANE) if pad_hidden else hidden_size
    dh = hp - hidden_size
    w1p = jnp.pad(w1, ((0, 0), (0, dh)))
    w2p = jnp.pad(w2, ((0, dh), (0, dh)))
    w3p = jnp.pad(w3, ((0, dh), (0, 0)))

    w1_obs = w1p[:observation_size]
    w1_act = w1p[observation_size:]
    b1 = jnp.zeros((1, hp), jnp.float32)
    b2 = jnp.zeros((1, hp), jnp.float32)
    b3 = jnp.zeros((1, observation_size), jnp.float32)
    return (w1_obs, w1_act, b1, w2p, b2, w3p, b3)


if __name__ == "__main__":
    # Small shapes consistent with the module: obs_size=16, action_size=8,
    # hidden_size=32, n_layers=3, activation='tanh'.
    observation_size, hidden_size, action_size = 16, 32, 8
    batch = 64

    key = jax.random.PRNGKey(0)
    k_obs, k_act, k_params = jax.random.split(key, 3)
    observation = jax.random.normal(k_obs, (batch, observation_size), jnp.float32)
    action = jax.random.normal(k_act, (batch, action_size), jnp.float32)
    params = init_params(k_params, observation_size, hidden_size, action_size,
                         output_gain=1.0)

    # Pallas path (forced even at demo size by min_pallas_batch=0).
    out = forward_dynamics_forward(observation, action, params, min_pallas_batch=0)
    out = jax.block_until_ready(out)

    # Pure-JAX reference using the UNPADDED weights to verify that hidden-dim
    # zero-padding is numerically neutral and forward semantics match PyTorch.
    w1_obs, w1_act, b1, w2, b2, w3, b3 = params
    w1 = jnp.concatenate([w1_obs[:, :hidden_size], w1_act[:, :hidden_size]], axis=0)
    x = jnp.concatenate([observation, action], axis=-1)
    ref = jnp.tanh(x @ w1 + b1[:, :hidden_size])
    ref = jnp.tanh(ref @ w2[:hidden_size, :hidden_size] + b2[:, :hidden_size])
    ref = ref @ w3[:hidden_size, :] + b3

    assert out.shape == (batch, observation_size)
    assert jnp.allclose(out, ref, atol=1e-5, rtol=1e-5)

    # Small-batch fallback path (dispatches to plain jnp below min_pallas_batch).
    out_small = forward_dynamics_forward(observation[:8], action[:8], params)
    out_small = jax.block_until_ready(out_small)
    assert out_small.shape == (8, observation_size)
    assert jnp.allclose(out_small, ref[:8], atol=1e-5, rtol=1e-5)

    # TODO(synk): state_distribution.sample (make_state_distribution) is external
    # to this module's forward pass and is not implemented here.
    print("KERNEL_OK")
</pallas_src>

<mosaic_0001>
module attributes {stable_mosaic.version = 11 : i64} {
  func.func @fdm_mlp_kernel(%arg0: i32, %arg1: memref<64x16xf32, #tpu.memory_space<vmem>>, %arg2: memref<64x8xf32, #tpu.memory_space<vmem>>, %arg3: memref<16x128xf32, #tpu.memory_space<vmem>>, %arg4: memref<8x128xf32, #tpu.memory_space<vmem>>, %arg5: memref<1x128xf32, #tpu.memory_space<vmem>>, %arg6: memref<128x128xf32, #tpu.memory_space<vmem>>, %arg7: memref<1x128xf32, #tpu.memory_space<vmem>>, %arg8: memref<128x16xf32, #tpu.memory_space<vmem>>, %arg9: memref<1x16xf32, #tpu.memory_space<vmem>>, %arg10: memref<64x16xf32, #tpu.memory_space<vmem>>) attributes {dimension_semantics = [#tpu.dimension_semantics<parallel>], iteration_bounds = array<i64: 1>, scalar_prefetch = 0 : i64, scratch_operands = 0 : i64, tpu.core_type = #tpu.core_type<tc>, window_params = [{transform_indices = @transform_0, window_bounds = array<i64: 64, 16>}, {transform_indices = @transform_1, window_bounds = array<i64: 64, 8>}, {pipeline_mode = #tpu.pipeline_mode<synchronous>, transform_indices = @transform_2, window_bounds = array<i64: 16, 128>}, {pipeline_mode = #tpu.pipeline_mode<synchronous>, transform_indices = @transform_3, window_bounds = array<i64: 8, 128>}, {pipeline_mode = #tpu.pipeline_mode<synchronous>, transform_indices = @transform_4, window_bounds = array<i64: 1, 128>}, {pipeline_mode = #tpu.pipeline_mode<synchronous>, transform_indices = @transform_5, window_bounds = array<i64: 128, 128>}, {pipeline_mode = #tpu.pipeline_mode<synchronous>, transform_indices = @transform_6, window_bounds = array<i64: 1, 128>}, {pipeline_mode = #tpu.pipeline_mode<synchronous>, transform_indices = @transform_7, window_bounds = array<i64: 128, 16>}, {pipeline_mode = #tpu.pipeline_mode<synchronous>, transform_indices = @transform_8, window_bounds = array<i64: 1, 16>}, {transform_indices = @transform_9, window_bounds = array<i64: 64, 16>}]} {
    %c0 = arith.constant 0 : index
    %c0_0 = arith.constant 0 : index
    %0 = vector.load %arg1[%c0, %c0_0] : memref<64x16xf32, #tpu.memory_space<vmem>>, vector<64x16xf32>
    %c0_1 = arith.constant 0 : index
    %c0_2 = arith.constant 0 : index
    %1 = vector.load %arg2[%c0_1, %c0_2] : memref<64x8xf32, #tpu.memory_space<vmem>>, vector<64x8xf32>
    %c0_3 = arith.constant 0 : index
    %c0_4 = arith.constant 0 : index
    %2 = vector.load %arg3[%c0_3, %c0_4] : memref<16x128xf32, #tpu.memory_space<vmem>>, vector<16x128xf32>
    %cst = arith.constant dense<0.000000e+00> : vector<64x128xf32>
    %3 = tpu.matmul %0, %2, %cst {dimension_numbers = #tpu.dot_dimension_numbers<[1], [0], [0], [1], [0, 0, 1, 1], [], []>} : vector<64x16xf32>, vector<16x128xf32>, vector<64x128xf32> -> vector<64x128xf32>
    %c0_5 = arith.constant 0 : index
    %c0_6 = arith.constant 0 : index
    %4 = vector.load %arg4[%c0_5, %c0_6] : memref<8x128xf32, #tpu.memory_space<vmem>>, vector<8x128xf32>
    %cst_7 = arith.constant dense<0.000000e+00> : vector<64x128xf32>
    %5 = tpu.matmul %1, %4, %cst_7 {dimension_numbers = #tpu.dot_dimension_numbers<[1], [0], [0], [1], [0, 0, 1, 1], [], []>} : vector<64x8xf32>, vector<8x128xf32>, vector<64x128xf32> -> vector<64x128xf32>
    %6 = arith.addf %3, %5 : vector<64x128xf32>
    %c0_8 = arith.constant 0 : index
    %c0_9 = arith.constant 0 : index
    %7 = vector.load %arg5[%c0_8, %c0_9] : memref<1x128xf32, #tpu.memory_space<vmem>>, vector<1x128xf32>
    %8 = vector.broadcast %7 : vector<1x128xf32> to vector<64x128xf32>
    %9 = arith.addf %6, %8 : vector<64x128xf32>
    %10 = math.tanh %9 : vector<64x128xf32>
    %c0_10 = arith.constant 0 : index
    %c0_11 = arith.constant 0 : index
    %11 = vector.load %arg6[%c0_10, %c0_11] : memref<128x128xf32, #tpu.memory_space<vmem>>, vector<128x128xf32>
    %cst_12 = arith.constant dense<0.000000e+00> : vector<64x128xf32>
    %12 = tpu.matmul %10, %11, %cst_12 {dimension_numbers = #tpu.dot_dimension_numbers<[1], [0], [0], [1], [0, 0, 1, 1], [], []>} : vector<64x128xf32>, vector<128x128xf32>, vector<64x128xf32> -> vector<64x128xf32>
    %c0_13 = arith.constant 0 : index
    %c0_14 = arith.constant 0 : index
    %13 = vector.load %arg7[%c0_13, %c0_14] : memref<1x128xf32, #tpu.memory_space<vmem>>, vector<1x128xf32>
    %14 = vector.broadcast %13 : vector<1x128xf32> to vector<64x128xf32>
    %15 = arith.addf %12, %14 : vector<64x128xf32>
    %16 = math.tanh %15 : vector<64x128xf32>
    %c0_15 = arith.constant 0 : index
    %c0_16 = arith.constant 0 : index
    %17 = vector.load %arg8[%c0_15, %c0_16] : memref<128x16xf32, #tpu.memory_space<vmem>>, vector<128x16xf32>
    %cst_17 = arith.constant dense<0.000000e+00> : vector<64x16xf32>
    %18 = tpu.matmul %16, %17, %cst_17 {dimension_numbers = #tpu.dot_dimension_numbers<[1], [0], [0], [1], [0, 0, 1, 1], [], []>} : vector<64x128xf32>, vector<128x16xf32>, vector<64x16xf32> -> vector<64x16xf32>
    %c0_18 = arith.constant 0 : index
    %c0_19 = arith.constant 0 : index
    %19 = vector.load %arg9[%c0_18, %c0_19] : memref<1x16xf32, #tpu.memory_space<vmem>>, vector<1x16xf32>
    %20 = vector.broadcast %19 : vector<1x16xf32> to vector<64x16xf32>
    %21 = arith.addf %18, %20 : vector<64x16xf32>
    %c0_20 = arith.constant 0 : index
    %c0_21 = arith.constant 0 : index
    %22 = vector.load %arg10[%c0_20, %c0_21] : memref<64x16xf32, #tpu.memory_space<vmem>>, vector<64x16xf32>
    tpu.vector_store %arg10[%c0_20, %c0_21], %21 {strides = array<i32>} : memref<64x16xf32, #tpu.memory_space<vmem>>, vector<64x16xf32>,
    return
  }
  func.func @transform_0(%arg0: i32) -> (i32, i32) {
    %c0_i32 = arith.constant 0 : i32
    %c0_i32_0 = arith.constant 0 : i32
    return %arg0, %c0_i32 : i32, i32
  }
  func.func @transform_1(%arg0: i32) -> (i32, i32) {
    %c0_i32 = arith.constant 0 : i32
    %c0_i32_0 = arith.constant 0 : i32
    return %arg0, %c0_i32 : i32, i32
  }
  func.func @transform_2(%arg0: i32) -> (i32, i32) {
    %c0_i32 = arith.constant 0 : i32
    %c0_i32_0 = arith.constant 0 : i32
    %c0_i32_1 = arith.constant 0 : i32
    return %c0_i32, %c0_i32_0 : i32, i32
  }
  func.func @transform_3(%arg0: i32) -> (i32, i32) {
    %c0_i32 = arith.constant 0 : i32
    %c0_i32_0 = arith.constant 0 : i32
    %c0_i32_1 = arith.constant 0 : i32
    return %c0_i32, %c0_i32_0 : i32, i32
  }
  func.func @transform_4(%arg0: i32) -> (i32, i32) {
    %c0_i32 = arith.constant 0 : i32
    %c0_i32_0 = arith.constant 0 : i32
    %c0_i32_1 = arith.constant 0 : i32
    return %c0_i32, %c0_i32_0 : i32, i32
  }
  func.func @transform_5(%arg0: i32) -> (i32, i32) {
    %c0_i32 = arith.constant 0 : i32
    %c0_i32_0 = arith.constant 0 : i32
    %c0_i32_1 = arith.constant 0 : i32
    return %c0_i32, %c0_i32_0 : i32, i32
  }
  func.func @transform_6(%arg0: i32) -> (i32, i32) {
    %c0_i32 = arith.constant 0 : i32
    %c0_i32_0 = arith.constant 0 : i32
    %c0_i32_1 = arith.constant 0 : i32
    return %c0_i32, %c0_i32_0 : i32, i32
  }
  func.func @transform_7(%arg0: i32) -> (i32, i32) {
    %c0_i32 = arith.constant 0 : i32
    %c0_i32_0 = arith.constant 0 : i32
    %c0_i32_1 = arith.constant 0 : i32
    return %c0_i32, %c0_i32_0 : i32, i32
  }
  func.func @transform_8(%arg0: i32) -> (i32, i32) {
    %c0_i32 = arith.constant 0 : i32
    %c0_i32_0 = arith.constant 0 : i32
    %c0_i32_1 = arith.constant 0 : i32
    return %c0_i32, %c0_i32_0 : i32, i32
  }
  func.func @transform_9(%arg0: i32) -> (i32, i32) {
    %c0_i32 = arith.constant 0 : i32
    %c0_i32_0 = arith.constant 0 : i32
    return %arg0, %c0_i32 : i32, i32
  }
}

</mosaic_0001>

<llo_original>
// kernel: tpu_custom_call.1
$region0: #{tpu_custom_call.1}
  #allocation0 [shape = 'u32[]', space=smem, size = 0x4, offset = 0x4, fixed_abs, tag = 'smem constant byte address 0x4 - core index']
  #allocation1 [shape = 'u32[144,128]{1,0:T(1,128)}', space=vmem, size = 0x12000, scoped, tag = 'internal scratch']
  %s0 = inlined_call_operand.vmem [shape: f32[64,16], index: 0, kind: input, shape index: {}]
  %s1 = inlined_call_operand.vmem [shape: f32[64,8], index: 1, kind: input, shape index: {}]
  %s2 = inlined_call_operand.vmem [shape: f32[16,128], index: 2, kind: input, shape index: {}]
  %s3 = inlined_call_operand.vmem [shape: f32[8,128], index: 3, kind: input, shape index: {}]
  %s4 = inlined_call_operand.vmem [shape: f32[1,128], index: 4, kind: input, shape index: {}]
  %s5 = inlined_call_operand.vmem [shape: f32[128,128], index: 5, kind: input, shape index: {}]
  %s6 = inlined_call_operand.vmem [shape: f32[1,128], index: 6, kind: input, shape index: {}]
  %s7 = inlined_call_operand.vmem [shape: f32[128,16], index: 7, kind: input, shape index: {}]
  %s8 = inlined_call_operand.vmem [shape: f32[1,16], index: 8, kind: input, shape index: {}]
  %s9 = inlined_call_operand.vmem [shape: f32[64,16], index: 9, kind: output, shape index: {}]
  %s10 = sld [smem:[#allocation0]]
  $region46: #{tpu_custom_call.1} parent=0
    _
  %s12 = ssub.s32 1, %s10
  %s13 = scalar_select 0, %s12, %s10
  // Predicated region
  $region2: #{tpu_custom_call.1} parent=0 // pred_check
    _
  $region3: #{tpu_custom_call.1} parent=0 // pred_check_branch
    %15 = sbr.rel (0) target = $region5
  $region4: #{tpu_custom_call.1} parent=0 // pred_region
    _
  $region5: #{tpu_custom_call.1} parent=0 // pred_fallthru
    _
  // Predicated region
  $region6: #{tpu_custom_call.1} parent=0 // pred_check
    _
  $region7: #{tpu_custom_call.1} parent=0 // pred_check_branch
    %17 = sbr.rel (0) target = $region9
  $region8: #{tpu_custom_call.1} parent=0 // pred_region
    _
  $region9: #{tpu_custom_call.1} parent=0 // pred_fallthru
    _
  // Predicated region
  $region10: #{tpu_custom_call.1} parent=0 // pred_check
    _
  $region11: #{tpu_custom_call.1} parent=0 // pred_check_branch
    %19 = sbr.rel (0) target = $region13
  $region12: #{tpu_custom_call.1} parent=0 // pred_region
    _
  $region13: #{tpu_custom_call.1} parent=0 // pred_fallthru
    _
  // Predicated region
  $region14: #{tpu_custom_call.1} parent=0 // pred_check
    _
  $region15: #{tpu_custom_call.1} parent=0 // pred_check_branch
    %21 = sbr.rel (0) target = $region17
  $region16: #{tpu_custom_call.1} parent=0 // pred_region
    _
  $region17: #{tpu_custom_call.1} parent=0 // pred_fallthru
    _
  // Predicated region
  $region18: #{tpu_custom_call.1} parent=0 // pred_check
    _
  $region19: #{tpu_custom_call.1} parent=0 // pred_check_branch
    %23 = sbr.rel (0) target = $region21
  $region20: #{tpu_custom_call.1} parent=0 // pred_region
    _
  $region21: #{tpu_custom_call.1} parent=0 // pred_fallthru
    _
  // Predicated region
  $region22: #{tpu_custom_call.1} parent=0 // pred_check
    _
  $region23: #{tpu_custom_call.1} parent=0 // pred_check_branch
    %25 = sbr.rel (0) target = $region25
  $region24: #{tpu_custom_call.1} parent=0 // pred_region
    _
  $region25: #{tpu_custom_call.1} parent=0 // pred_fallthru
    _
  // Predicated region
  $region26: #{tpu_custom_call.1} parent=0 // pred_check
    _
  $region27: #{tpu_custom_call.1} parent=0 // pred_check_branch
    %27 = sbr.rel (0) target = $region29
  $region28: #{tpu_custom_call.1} parent=0 // pred_region
    _
  $region29: #{tpu_custom_call.1} parent=0 // pred_fallthru
    _
  // Predicated region
  $region30: #{tpu_custom_call.1} parent=0 // pred_check
    _
  $region31: #{tpu_custom_call.1} parent=0 // pred_check_branch
    %29 = sbr.rel (0) target = $region33
  $region32: #{tpu_custom_call.1} parent=0 // pred_region
    _
  $region33: #{tpu_custom_call.1} parent=0 // pred_fallthru
    _
  // Predicated region
  $region34: #{tpu_custom_call.1} parent=0 // pred_check
    _
  $region35: #{tpu_custom_call.1} parent=0 // pred_check_branch
    %31 = sbr.rel (0) target = $region37
  $region36: #{tpu_custom_call.1} parent=0 // pred_region
    _
  $region37: #{tpu_custom_call.1} parent=0 // pred_fallthru
    _
  %v32 = vld [vmem:[%s0] sm:$0xff]
  %v33 = vld [vmem:[%s0 + $0x8] sm:$0xff]
  %v34 = vld [vmem:[%s0 + $0x10] sm:$0xff]
  %v35 = vld [vmem:[%s0 + $0x18] sm:$0xff]
  %v36 = vld [vmem:[%s0 + $0x20] sm:$0xff]
  %v37 = vld [vmem:[%s0 + $0x28] sm:$0xff]
  %v38 = vld [vmem:[%s0 + $0x30] sm:$0xff]
  %v39 = vld [vmem:[%s0 + $0x38] sm:$0xff]
  %v40 = vld [vmem:[%s1] sm:$0xff]
  %v41 = vld [vmem:[%s1 + $0x8] sm:$0xff]
  %v42 = vld [vmem:[%s1 + $0x10] sm:$0xff]
  %v43 = vld [vmem:[%s1 + $0x18] sm:$0xff]
  %v44 = vld [vmem:[%s1 + $0x20] sm:$0xff]
  %v45 = vld [vmem:[%s1 + $0x28] sm:$0xff]
  %v46 = vld [vmem:[%s1 + $0x30] sm:$0xff]
  %v47 = vld [vmem:[%s1 + $0x38] sm:$0xff]
  %v48 = vld [vmem:[%s2] sm:$0xff]
  %v49 = vld [vmem:[%s2 + $0x8] sm:$0xff]
  %v50 = vld [vmem:[%s3] sm:$0xff]
  %vm51 = vcmask 64512
  %v53 = vsel %vm51, %v40, 0
  %v56 = vsel %vm51, %v41, 0
  %v59 = vsel %vm51, %v42, 0
  %v62 = vsel %vm51, %v43, 0
  %v65 = vsel %vm51, %v44, 0
  %v68 = vsel %vm51, %v45, 0
  %v71 = vsel %vm51, %v46, 0
  %v74 = vsel %vm51, %v47, 0
  %76 = vmatprep.subr.mxu0 0.0
  %77 = vmatpush1.msra.mxu0 %v50
  %78 = vmatprep.subr.mxu0 0.0
  %79 = vmatpush1.msra.mxu0 0.0
  %80 = vmatprep.subr.mxu0 0.0
  %81 = vmatpush1.msra.mxu0 0.0
  %82 = vmatprep.subr.mxu0 0.0
  %83 = vmatpush1.msra.mxu0 0.0
  %84 = vmatprep.subr.mxu0 0.0
  %85 = vmatpush1.msra.mxu0 0.0
  %86 = vmatprep.subr.mxu0 0.0
  %87 = vmatpush1.msra.mxu0 0.0
  %88 = vmatprep.subr.mxu0 0.0
  %89 = vmatpush1.msra.mxu0 0.0
  %90 = vmatprep.subr.mxu0 0.0
  %91 = vmatpush1.msra.mxu0 0.0
  %92 = vmatprep.subr.mxu0 0.0
  %93 = vmatpush1.msra.mxu0 0.0
  %94 = vmatprep.subr.mxu0 0.0
  %95 = vmatpush1.msra.mxu0 0.0
  %96 = vmatprep.subr.mxu0 0.0
  %97 = vmatpush1.msra.mxu0 0.0
  %98 = vmatprep.subr.mxu0 0.0
  %99 = vmatpush1.msra.mxu0 0.0
  %100 = vmatprep.subr.mxu0 0.0
  %101 = vmatpush1.msra.mxu0 0.0
  %102 = vmatprep.subr.mxu0 0.0
  %103 = vmatpush1.msra.mxu0 0.0
  %104 = vmatprep.subr.mxu0 0.0
  %105 = vmatpush1.msra.mxu0 0.0
  %106 = vmatprep.subr.mxu0 0.0
  %107 = vmatpush1.msra.mxu0 0.0
  %108 = vmatprep.subr.mxu0 0.0
  %109 = vmatpush1.msra.mxu0 0.0
  %110 = vmatprep.subr.mxu0 0.0
  %111 = vmatpush1.msra.mxu0 0.0
  %112 = vmatprep.subr.mxu0 0.0
  %113 = vmatpush1.msra.mxu0 0.0
  %114 = vmatprep.subr.mxu0 0.0
  %115 = vmatpush1.msra.mxu0 0.0
  %116 = vmatprep.subr.mxu0 0.0
  %117 = vmatpush1.msra.mxu0 0.0
  %118 = vmatprep.subr.mxu0 0.0
  %119 = vmatpush1.msra.mxu0 0.0
  %120 = vmatprep.subr.mxu0 0.0
  %121 = vmatpush1.msra.mxu0 0.0
  %122 = vmatprep.subr.mxu0 0.0
  %123 = vmatpush1.msra.mxu0 0.0
  %124 = vmatprep.subr.mxu0 0.0
  %125 = vmatpush1.msra.mxu0 0.0
  %126 = vmatprep.subr.mxu0 0.0
  %127 = vmatpush1.msra.mxu0 0.0
  %128 = vmatprep.subr.mxu0 0.0
  %129 = vmatpush1.msra.mxu0 0.0
  %130 = vmatprep.subr.mxu0 0.0
  %131 = vmatpush1.msra.mxu0 0.0
  %132 = vmatprep.subr.mxu0 0.0
  %133 = vmatpush1.msra.mxu0 0.0
  %134 = vmatprep.subr.mxu0 0.0
  %135 = vmatpush1.msra.mxu0 0.0
  %136 = vmatprep.subr.mxu0 0.0
  %137 = vmatpush1.msra.mxu0 0.0
  %138 = vmatprep.subr.mxu0 0.0
  %139 = vmatpush1.msra.mxu0 0.0
  %140 = vmatprep.mubr.f32.mxu0 0.0
  %141 = vmatmul.mubr.f32.gmra.mrb[0].mxu0 %v53
  %v142 = vpop.f32.mrb[0].mxu0
  %v143 = vadd.f32 0.0, %v142
  %v144 = vpop.f32.mrb[0].mxu0
  %145 = vmatprep.mubr.f32.mxu0 0.0
  %146 = vmatmul.mubr.f32.gmra.mrb[0].mxu0 %v56
  %v147 = vpop.f32.mrb[0].mxu0
  %v148 = vadd.f32 0.0, %v147
  %v149 = vpop.f32.mrb[0].mxu0
  %150 = vmatprep.mubr.f32.mxu0 0.0
  %151 = vmatmul.mubr.f32.gmra.mrb[0].mxu0 %v59
  %v152 = vpop.f32.mrb[0].mxu0
  %v153 = vadd.f32 0.0, %v152
  %v154 = vpop.f32.mrb[0].mxu0
  %155 = vmatprep.mubr.f32.mxu0 0.0
  %156 = vmatmul.mubr.f32.gmra.mrb[0].mxu0 %v62
  %v157 = vpop.f32.mrb[0].mxu0
  %v158 = vadd.f32 0.0, %v157
  %v159 = vpop.f32.mrb[0].mxu0
  %160 = vmatprep.mubr.f32.mxu0 0.0
  %161 = vmatmul.mubr.f32.gmra.mrb[0].mxu0 %v65
  %v162 = vpop.f32.mrb[0].mxu0
  %v163 = vadd.f32 0.0, %v162
  %v164 = vpop.f32.mrb[0].mxu0
  %165 = vmatprep.mubr.f32.mxu0 0.0
  %166 = vmatmul.mubr.f32.gmra.mrb[0].mxu0 %v68
  %v167 = vpop.f32.mrb[0].mxu0
  %v168 = vadd.f32 0.0, %v167
  %v169 = vpop.f32.mrb[0].mxu0
  %170 = vmatprep.mubr.f32.mxu0 0.0
  %171 = vmatmul.mubr.f32.gmra.mrb[0].mxu0 %v71
  %v172 = vpop.f32.mrb[0].mxu0
  %v173 = vadd.f32 0.0, %v172
  %v174 = vpop.f32.mrb[0].mxu0
  %175 = vmatprep.mubr.f32.mxu0 0.0
  %176 = vmatmul.mubr.f32.gmra.mrb[0].mxu0 %v74
  %v177 = vpop.f32.mrb[0].mxu0
  %v178 = vadd.f32 0.0, %v177
  %v179 = vpop.f32.mrb[0].mxu0
  %180 = vdwg.mxu0
  %vm181 = vcmask 130048
  %v183 = vsel %vm181, %v32, 0
  %v186 = vsel %vm181, %v33, 0
  %v189 = vsel %vm181, %v34, 0
  %v192 = vsel %vm181, %v35, 0
  %v195 = vsel %vm181, %v36, 0
  %v198 = vsel %vm181, %v37, 0
  %v201 = vsel %vm181, %v38, 0
  %v204 = vsel %vm181, %v39, 0
  %206 = vmatprep.subr.mxu0 0.0
  %207 = vmatpush1.msra.mxu0 %v48
  %208 = vmatprep.subr.mxu0 0.0
  %209 = vmatpush1.msra.mxu0 %v49
  %210 = vmatprep.subr.mxu0 0.0
  %211 = vmatpush1.msra.mxu0 0.0
  %212 = vmatprep.subr.mxu0 0.0
  %213 = vmatpush1.msra.mxu0 0.0
  %214 = vmatprep.subr.mxu0 0.0
  %215 = vmatpush1.msra.mxu0 0.0
  %216 = vmatprep.subr.mxu0 0.0
  %217 = vmatpush1.msra.mxu0 0.0
  %218 = vmatprep.subr.mxu0 0.0
  %219 = vmatpush1.msra.mxu0 0.0
  %220 = vmatprep.subr.mxu0 0.0
  %221 = vmatpush1.msra.mxu0 0.0
  %222 = vmatprep.subr.mxu0 0.0
  %223 = vmatpush1.msra.mxu0 0.0
  %224 = vmatprep.subr.mxu0 0.0
  %225 = vmatpush1.msra.mxu0 0.0
  %226 = vmatprep.subr.mxu0 0.0
  %227 = vmatpush1.msra.mxu0 0.0
  %228 = vmatprep.subr.mxu0 0.0
  %229 = vmatpush1.msra.mxu0 0.0
  %230 = vmatprep.subr.mxu0 0.0
  %231 = vmatpush1.msra.mxu0 0.0
  %232 = vmatprep.subr.mxu0 0.0
  %233 = vmatpush1.msra.mxu0 0.0
  %234 = vmatprep.subr.mxu0 0.0
  %235 = vmatpush1.msra.mxu0 0.0
  %236 = vmatprep.subr.mxu0 0.0
  %237 = vmatpush1.msra.mxu0 0.0
  %238 = vmatprep.subr.mxu0 0.0
  %239 = vmatpush1.msra.mxu0 0.0
  %240 = vmatprep.subr.mxu0 0.0
  %241 = vmatpush1.msra.mxu0 0.0
  %242 = vmatprep.subr.mxu0 0.0
  %243 = vmatpush1.msra.mxu0 0.0
  %244 = vmatprep.subr.mxu0 0.0
  %245 = vmatpush1.msra.mxu0 0.0
  %246 = vmatprep.subr.mxu0 0.0
  %247 = vmatpush1.msra.mxu0 0.0
  %248 = vmatprep.subr.mxu0 0.0
  %249 = vmatpush1.msra.mxu0 0.0
  %250 = vmatprep.subr.mxu0 0.0
  %251 = vmatpush1.msra.mxu0 0.0
  %252 = vmatprep.subr.mxu0 0.0
  %253 = vmatpush1.msra.mxu0 0.0
  %254 = vmatprep.subr.mxu0 0.0
  %255 = vmatpush1.msra.mxu0 0.0
  %256 = vmatprep.subr.mxu0 0.0
  %257 = vmatpush1.msra.mxu0 0.0
  %258 = vmatprep.subr.mxu0 0.0
  %259 = vmatpush1.msra.mxu0 0.0
  %260 = vmatprep.subr.mxu0 0.0
  %261 = vmatpush1.msra.mxu0 0.0
  %262 = vmatprep.subr.mxu0 0.0
  %263 = vmatpush1.msra.mxu0 0.0
  %264 = vmatprep.subr.mxu0 0.0
  %265 = vmatpush1.msra.mxu0 0.0
  %266 = vmatprep.subr.mxu0 0.0
  %267 = vmatpush1.msra.mxu0 0.0
  %268 = vmatprep.subr.mxu0 0.0
  %269 = vmatpush1.msra.mxu0 0.0
  %270 = vmatprep.mubr.f32.mxu0 0.0
  %271 = vmatmul.mubr.f32.gmra.mrb[0].mxu0 %v183
  %v272 = vpop.f32.mrb[0].mxu0
  %v273 = vadd.f32 %v143, %v272
  %v274 = vpop.f32.mrb[0].mxu0
  %275 = vmatprep.mubr.f32.mxu0 0.0
  %276 = vmatmul.mubr.f32.gmra.mrb[0].mxu0 %v186
  %v277 = vpop.f32.mrb[0].mxu0
  %v278 = vadd.f32 %v148, %v277
  %v279 = vpop.f32.mrb[0].mxu0
  %280 = vmatprep.mubr.f32.mxu0 0.0
  %281 = vmatmul.mubr.f32.gmra.mrb[0].mxu0 %v189
  %v282 = vpop.f32.mrb[0].mxu0
  %v283 = vadd.f32 %v153, %v282
  %v284 = vpop.f32.mrb[0].mxu0
  %285 = vmatprep.mubr.f32.mxu0 0.0
  %286 = vmatmul.mubr.f32.gmra.mrb[0].mxu0 %v192
  %v287 = vpop.f32.mrb[0].mxu0
  %v288 = vadd.f32 %v158, %v287
  %v289 = vpop.f32.mrb[0].mxu0
  %290 = vmatprep.mubr.f32.mxu0 0.0
  %291 = vmatmul.mubr.f32.gmra.mrb[0].mxu0 %v195
  %v292 = vpop.f32.mrb[0].mxu0
  %v293 = vadd.f32 %v163, %v292
  %v294 = vpop.f32.mrb[0].mxu0
  %295 = vmatprep.mubr.f32.mxu0 0.0
  %296 = vmatmul.mubr.f32.gmra.mrb[0].mxu0 %v198
  %v297 = vpop.f32.mrb[0].mxu0
  %v298 = vadd.f32 %v168, %v297
  %v299 = vpop.f32.mrb[0].mxu0
  %300 = vmatprep.mubr.f32.mxu0 0.0
  %301 = vmatmul.mubr.f32.gmra.mrb[0].mxu0 %v201
  %v302 = vpop.f32.mrb[0].mxu0
  %v303 = vadd.f32 %v173, %v302
  %v304 = vpop.f32.mrb[0].mxu0
  %305 = vmatprep.mubr.f32.mxu0 0.0
  %306 = vmatmul.mubr.f32.gmra.mrb[0].mxu0 %v204
  %v307 = vpop.f32.mrb[0].mxu0
  %v308 = vadd.f32 %v178, %v307
  %v309 = vpop.f32.mrb[0].mxu0
  %310 = vdwg.mxu0
  %v311 = vld [vmem:[%s4] sm:$0x1]
  %v313 = vlaneseq
  %v314 = vshrl.u32 %v313, 7
  %v315 = vsub.s32 0, %v314
  %v316 = vrot.slane %v311, %v315
  %v318 = vadd.f32 %v273, %v316
  %v319 = vadd.f32 %v278, %v316
  %v320 = vadd.f32 %v283, %v316
  %v321 = vadd.f32 %v288, %v316
  %v322 = vadd.f32 %v293, %v316
  %v323 = vadd.f32 %v298, %v316
  %v324 = vadd.f32 %v303, %v316
  %v325 = vadd.f32 %v308, %v316
  %v326 = vtanh.pop %v318
  %v327 = vtanh.pop %v319
  %v328 = vtanh.pop %v320
  %v329 = vtanh.pop %v321
  %v330 = vtanh.pop %v322
  %v331 = vtanh.pop %v323
  %v332 = vtanh.pop %v324
  %v333 = vtanh.pop %v325
  %v334 = vld [vmem:[%s5] sm:$0xff]
  %v335 = vld [vmem:[%s5 + $0x8] sm:$0xff]
  %v336 = vld [vmem:[%s5 + $0x10] sm:$0xff]
  %v337 = vld [vmem:[%s5 + $0x18] sm:$0xff]
  %v338 = vld [vmem:[%s5 + $0x20] sm:$0xff]
  %v339 = vld [vmem:[%s5 + $0x28] sm:$0xff]
  %v340 = vld [vmem:[%s5 + $0x30] sm:$0xff]
  %v341 = vld [vmem:[%s5 + $0x38] sm:$0xff]
  %v342 = vld [vmem:[%s5 + $0x40] sm:$0xff]
  %v343 = vld [vmem:[%s5 + $0x48] sm:$0xff]
  %v344 = vld [vmem:[%s5 + $0x50] sm:$0xff]
  %v345 = vld [vmem:[%s5 + $0x58] sm:$0xff]
  %v346 = vld [vmem:[%s5 + $0x60] sm:$0xff]
  %v347 = vld [vmem:[%s5 + $0x68] sm:$0xff]
  %v348 = vld [vmem:[%s5 + $0x70] sm:$0xff]
  %v349 = vld [vmem:[%s5 + $0x78] sm:$0xff]
  %v350 = vld [vmem:[%s6] sm:$0x1]
  %v352 = vlaneseq
  %v353 = vshrl.u32 %v352, 7
  %v354 = vsub.s32 0, %v353
  %v355 = vrot.slane %v350, %v354
  %357 = vmatprep.subr.mxu0 0.0
  %358 = vmatpush1.msra.mxu0 %v334
  %359 = vmatprep.subr.mxu0 0.0
  %360 = vmatpush1.msra.mxu0 %v335
  %361 = vmatprep.subr.mxu0 0.0
  %362 = vmatpush1.msra.mxu0 %v336
  %363 = vmatprep.subr.mxu0 0.0
  %364 = vmatpush1.msra.mxu0 %v337
  %365 = vmatprep.subr.mxu0 0.0
  %366 = vmatpush1.msra.mxu0 %v338
  %367 = vmatprep.subr.mxu0 0.0
  %368 = vmatpush1.msra.mxu0 %v339
  %369 = vmatprep.subr.mxu0 0.0
  %370 = vmatpush1.msra.mxu0 %v340
  %371 = vmatprep.subr.mxu0 0.0
  %372 = vmatpush1.msra.mxu0 %v341
  %373 = vmatprep.subr.mxu0 0.0
  %374 = vmatpush1.msra.mxu0 %v342
  %375 = vmatprep.subr.mxu0 0.0
  %376 = vmatpush1.msra.mxu0 %v343
  %377 = vmatprep.subr.mxu0 0.0
  %378 = vmatpush1.msra.mxu0 %v344
  %379 = vmatprep.subr.mxu0 0.0
  %380 = vmatpush1.msra.mxu0 %v345
  %381 = vmatprep.subr.mxu0 0.0
  %382 = vmatpush1.msra.mxu0 %v346
  %383 = vmatprep.subr.mxu0 0.0
  %384 = vmatpush1.msra.mxu0 %v347
  %385 = vmatprep.subr.mxu0 0.0
  %386 = vmatpush1.msra.mxu0 %v348
  %387 = vmatprep.subr.mxu0 0.0
  %388 = vmatpush1.msra.mxu0 %v349
  %389 = vmatprep.subr.mxu0 0.0
  %390 = vmatpush1.msra.mxu0 0.0
  %391 = vmatprep.subr.mxu0 0.0
  %392 = vmatpush1.msra.mxu0 0.0
  %393 = vmatprep.subr.mxu0 0.0
  %394 = vmatpush1.msra.mxu0 0.0
  %395 = vmatprep.subr.mxu0 0.0
  %396 = vmatpush1.msra.mxu0 0.0
  %397 = vmatprep.subr.mxu0 0.0
  %398 = vmatpush1.msra.mxu0 0.0
  %399 = vmatprep.subr.mxu0 0.0
  %400 = vmatpush1.msra.mxu0 0.0
  %401 = vmatprep.subr.mxu0 0.0
  %402 = vmatpush1.msra.mxu0 0.0
  %403 = vmatprep.subr.mxu0 0.0
  %404 = vmatpush1.msra.mxu0 0.0
  %405 = vmatprep.subr.mxu0 0.0
  %406 = vmatpush1.msra.mxu0 0.0
  %407 = vmatprep.subr.mxu0 0.0
  %408 = vmatpush1.msra.mxu0 0.0
  %409 = vmatprep.subr.mxu0 0.0
  %410 = vmatpush1.msra.mxu0 0.0
  %411 = vmatprep.subr.mxu0 0.0
  %412 = vmatpush1.msra.mxu0 0.0
  %413 = vmatprep.subr.mxu0 0.0
  %414 = vmatpush1.msra.mxu0 0.0
  %415 = vmatprep.subr.mxu0 0.0
  %416 = vmatpush1.msra.mxu0 0.0
  %417 = vmatprep.subr.mxu0 0.0
  %418 = vmatpush1.msra.mxu0 0.0
  %419 = vmatprep.subr.mxu0 0.0
  %420 = vmatpush1.msra.mxu0 0.0
  %421 = vmatprep.mubr.f32.mxu0 0.0
  %422 = vmatmul.mubr.f32.gmra.mrb[0].mxu0 %v326
  %v423 = vpop.f32.mrb[0].mxu0
  %v424 = vadd.f32 %v355, %v423
  %v425 = vpop.f32.mrb[0].mxu0
  %426 = vmatprep.mubr.f32.mxu0 0.0
  %427 = vmatmul.mubr.f32.gmra.mrb[0].mxu0 %v327
  %v428 = vpop.f32.mrb[0].mxu0
  %v429 = vadd.f32 %v355, %v428
  %v430 = vpop.f32.mrb[0].mxu0
  %431 = vmatprep.mubr.f32.mxu0 0.0
  %432 = vmatmul.mubr.f32.gmra.mrb[0].mxu0 %v328
  %v433 = vpop.f32.mrb[0].mxu0
  %v434 = vadd.f32 %v355, %v433
  %v435 = vpop.f32.mrb[0].mxu0
  %436 = vmatprep.mubr.f32.mxu0 0.0
  %437 = vmatmul.mubr.f32.gmra.mrb[0].mxu0 %v329
  %v438 = vpop.f32.mrb[0].mxu0
  %v439 = vadd.f32 %v355, %v438
  %v440 = vpop.f32.mrb[0].mxu0
  %441 = vmatprep.mubr.f32.mxu0 0.0
  %442 = vmatmul.mubr.f32.gmra.mrb[0].mxu0 %v330
  %v443 = vpop.f32.mrb[0].mxu0
  %v444 = vadd.f32 %v355, %v443
  %v445 = vpop.f32.mrb[0].mxu0
  %446 = vmatprep.mubr.f32.mxu0 0.0
  %447 = vmatmul.mubr.f32.gmra.mrb[0].mxu0 %v331
  %v448 = vpop.f32.mrb[0].mxu0
  %v449 = vadd.f32 %v355, %v448
  %v450 = vpop.f32.mrb[0].mxu0
  %451 = vmatprep.mubr.f32.mxu0 0.0
  %452 = vmatmul.mubr.f32.gmra.mrb[0].mxu0 %v332
  %v453 = vpop.f32.mrb[0].mxu0
  %v454 = vadd.f32 %v355, %v453
  %v455 = vpop.f32.mrb[0].mxu0
  %456 = vmatprep.mubr.f32.mxu0 0.0
  %457 = vmatmul.mubr.f32.gmra.mrb[0].mxu0 %v333
  %v458 = vpop.f32.mrb[0].mxu0
  %v459 = vadd.f32 %v355, %v458
  %v460 = vpop.f32.mrb[0].mxu0
  %461 = vdwg.mxu0
  %v462 = vtanh.pop %v424
  %v463 = vtanh.pop %v429
  %v464 = vtanh.pop %v434
  %v465 = vtanh.pop %v439
  %v466 = vtanh.pop %v444
  %v467 = vtanh.pop %v449
  %v468 = vtanh.pop %v454
  %v469 = vtanh.pop %v459
  %v470 = vld [vmem:[%s7] sm:$0xff]
  %v471 = vld [vmem:[%s7 + $0x8] sm:$0xff]
  %v472 = vld [vmem:[%s7 + $0x10] sm:$0xff]
  %v473 = vld [vmem:[%s7 + $0x18] sm:$0xff]
  %v474 = vld [vmem:[%s7 + $0x20] sm:$0xff]
  %v475 = vld [vmem:[%s7 + $0x28] sm:$0xff]
  %v476 = vld [vmem:[%s7 + $0x30] sm:$0xff]
  %v477 = vld [vmem:[%s7 + $0x38] sm:$0xff]
  %v478 = vld [vmem:[%s7 + $0x40] sm:$0xff]
  %v479 = vld [vmem:[%s7 + $0x48] sm:$0xff]
  %v480 = vld [vmem:[%s7 + $0x50] sm:$0xff]
  %v481 = vld [vmem:[%s7 + $0x58] sm:$0xff]
  %v482 = vld [vmem:[%s7 + $0x60] sm:$0xff]
  %v483 = vld [vmem:[%s7 + $0x68] sm:$0xff]
  %v484 = vld [vmem:[%s7 + $0x70] sm:$0xff]
  %v485 = vld [vmem:[%s7 + $0x78] sm:$0xff]
  %v486 = vld [vmem:[%s8] sm:$0x1]
  %v488 = vlaneseq
  %v489 = vshrl.u32 %v488, 7
  %v490 = vsub.s32 0, %v489
  %v491 = vrot.slane %v486, %v490
  %493 = vmatprep.subr.mxu0 0.0
  %494 = vmatpush1.msra.mxu0 %v470
  %495 = vmatprep.subr.mxu0 0.0
  %496 = vmatpush1.msra.mxu0 %v471
  %497 = vmatprep.subr.mxu0 0.0
  %498 = vmatpush1.msra.mxu0 %v472
  %499 = vmatprep.subr.mxu0 0.0
  %500 = vmatpush1.msra.mxu0 %v473
  %501 = vmatprep.subr.mxu0 0.0
  %502 = vmatpush1.msra.mxu0 %v474
  %503 = vmatprep.subr.mxu0 0.0
  %504 = vmatpush1.msra.mxu0 %v475
  %505 = vmatprep.subr.mxu0 0.0
  %506 = vmatpush1.msra.mxu0 %v476
  %507 = vmatprep.subr.mxu0 0.0
  %508 = vmatpush1.msra.mxu0 %v477
  %509 = vmatprep.subr.mxu0 0.0
  %510 = vmatpush1.msra.mxu0 %v478
  %511 = vmatprep.subr.mxu0 0.0
  %512 = vmatpush1.msra.mxu0 %v479
  %513 = vmatprep.subr.mxu0 0.0
  %514 = vmatpush1.msra.mxu0 %v480
  %515 = vmatprep.subr.mxu0 0.0
  %516 = vmatpush1.msra.mxu0 %v481
  %517 = vmatprep.subr.mxu0 0.0
  %518 = vmatpush1.msra.mxu0 %v482
  %519 = vmatprep.subr.mxu0 0.0
  %520 = vmatpush1.msra.mxu0 %v483
  %521 = vmatprep.subr.mxu0 0.0
  %522 = vmatpush1.msra.mxu0 %v484
  %523 = vmatprep.subr.mxu0 0.0
  %524 = vmatpush1.msra.mxu0 %v485
  %525 = vmatprep.subr.mxu0 0.0
  %526 = vmatpush1.msra.mxu0 0.0
  %527 = vmatprep.subr.mxu0 0.0
  %528 = vmatpush1.msra.mxu0 0.0
  %529 = vmatprep.subr.mxu0 0.0
  %530 = vmatpush1.msra.mxu0 0.0
  %531 = vmatprep.subr.mxu0 0.0
  %532 = vmatpush1.msra.mxu0 0.0
  %533 = vmatprep.subr.mxu0 0.0
  %534 = vmatpush1.msra.mxu0 0.0
  %535 = vmatprep.subr.mxu0 0.0
  %536 = vmatpush1.msra.mxu0 0.0
  %537 = vmatprep.subr.mxu0 0.0
  %538 = vmatpush1.msra.mxu0 0.0
  %539 = vmatprep.subr.mxu0 0.0
  %540 = vmatpush1.msra.mxu0 0.0
  %541 = vmatprep.subr.mxu0 0.0
  %542 = vmatpush1.msra.mxu0 0.0
  %543 = vmatprep.subr.mxu0 0.0
  %544 = vmatpush1.msra.mxu0 0.0
  %545 = vmatprep.subr.mxu0 0.0
  %546 = vmatpush1.msra.mxu0 0.0
  %547 = vmatprep.subr.mxu0 0.0
  %548 = vmatpush1.msra.mxu0 0.0
  %549 = vmatprep.subr.mxu0 0.0
  %550 = vmatpush1.msra.mxu0 0.0
  %551 = vmatprep.subr.mxu0 0.0
  %552 = vmatpush1.msra.mxu0 0.0
  %553 = vmatprep.subr.mxu0 0.0
  %554 = vmatpush1.msra.mxu0 0.0
  %555 = vmatprep.subr.mxu0 0.0
  %556 = vmatpush1.msra.mxu0 0.0
  %557 = vmatprep.mubr.f32.mxu0 0.0
  %558 = vmatmul.mubr.f32.gmra.mrb[0].mxu0 %v462
  %v559 = vpop.f32.mrb[0].mxu0
  %v560 = vadd.f32 %v491, %v559
  %v561 = vpop.f32.mrb[0].mxu0
  %562 = vmatprep.mubr.f32.mxu0 0.0
  %563 = vmatmul.mubr.f32.gmra.mrb[0].mxu0 %v463
  %v564 = vpop.f32.mrb[0].mxu0
  %v565 = vadd.f32 %v491, %v564
  %v566 = vpop.f32.mrb[0].mxu0
  %567 = vmatprep.mubr.f32.mxu0 0.0
  %568 = vmatmul.mubr.f32.gmra.mrb[0].mxu0 %v464
  %v569 = vpop.f32.mrb[0].mxu0
  %v570 = vadd.f32 %v491, %v569
  %v571 = vpop.f32.mrb[0].mxu0
  %572 = vmatprep.mubr.f32.mxu0 0.0
  %573 = vmatmul.mubr.f32.gmra.mrb[0].mxu0 %v465
  %v574 = vpop.f32.mrb[0].mxu0
  %v575 = vadd.f32 %v491, %v574
  %v576 = vpop.f32.mrb[0].mxu0
  %577 = vmatprep.mubr.f32.mxu0 0.0
  %578 = vmatmul.mubr.f32.gmra.mrb[0].mxu0 %v466
  %v579 = vpop.f32.mrb[0].mxu0
  %v580 = vadd.f32 %v491, %v579
  %v581 = vpop.f32.mrb[0].mxu0
  %582 = vmatprep.mubr.f32.mxu0 0.0
  %583 = vmatmul.mubr.f32.gmra.mrb[0].mxu0 %v467
  %v584 = vpop.f32.mrb[0].mxu0
  %v585 = vadd.f32 %v491, %v584
  %v586 = vpop.f32.mrb[0].mxu0
  %587 = vmatprep.mubr.f32.mxu0 0.0
  %588 = vmatmul.mubr.f32.gmra.mrb[0].mxu0 %v468
  %v589 = vpop.f32.mrb[0].mxu0
  %v590 = vadd.f32 %v491, %v589
  %v591 = vpop.f32.mrb[0].mxu0
  %592 = vmatprep.mubr.f32.mxu0 0.0
  %593 = vmatmul.mubr.f32.gmra.mrb[0].mxu0 %v469
  %v594 = vpop.f32.mrb[0].mxu0
  %v595 = vadd.f32 %v491, %v594
  %v596 = vpop.f32.mrb[0].mxu0
  %597 = vdwg.mxu0
  %598 = vst.msk [vmem:[%s9] sm:$0xff] %vm181, %v560
  %599 = vst.msk [vmem:[%s9 + $0x8] sm:$0xff] %vm181, %v565
  %600 = vst.msk [vmem:[%s9 + $0x10] sm:$0xff] %vm181, %v570
  %601 = vst.msk [vmem:[%s9 + $0x18] sm:$0xff] %vm181, %v575
  %602 = vst.msk [vmem:[%s9 + $0x20] sm:$0xff] %vm181, %v580
  %603 = vst.msk [vmem:[%s9 + $0x28] sm:$0xff] %vm181, %v585
  %604 = vst.msk [vmem:[%s9 + $0x30] sm:$0xff] %vm181, %v590
  %605 = vst.msk [vmem:[%s9 + $0x38] sm:$0xff] %vm181, %v595
  // Predicated region
  $region38: #{tpu_custom_call.1} parent=0 // pred_check
    _
  $region39: #{tpu_custom_call.1} parent=0 // pred_check_branch
    %607 = sbr.rel (0) target = $region41
  $region40: #{tpu_custom_call.1} parent=0 // pred_region
    _
  $region41: #{tpu_custom_call.1} parent=0 // pred_fallthru
    _
  // Predicated region
  $region42: #{tpu_custom_call.1} parent=0 // pred_check
    _
  $region43: #{tpu_custom_call.1} parent=0 // pred_check_branch
    %609 = sbr.rel (0) target = $region45
  $region44: #{tpu_custom_call.1} parent=0 // pred_region
    _
  $region45: #{tpu_custom_call.1} parent=0 // pred_fallthru
    _

</llo_original>
